<compile_context>
chip_gen: v5e
topology: v5e:2x2
jax: 0.10.0
libtpu: 0.0.40
codegen_flags: <defaults>
</compile_context>

<pallas_src>
import jax
import jax.numpy as jnp
from jax.experimental import pallas as pl
from jax.experimental.pallas import tpu as pltpu

HIDDEN = 64


# ----------------------------------------------------------------------------
# Pallas kernel: one invocation covers the whole rollout.
# ----------------------------------------------------------------------------
def mlpbase_kernel(
    # inputs
    x_ref, m_ref, s0_ref,
    # packed parameters (VMEM-resident)
    w1_ref, b1_ref, w2_ref, b2_ref, wg_ref, bg_ref, whh_ref, bhh_ref,
    # outputs
    val_ref, hid_ref, st_ref,
    # scratch
    g_scratch,
):
    T, N, _ = m_ref.shape
    H = HIDDEN

    # ---- batched non-recurrent phase over M = T*N rows ----
    x = x_ref[...]                                            # (M, F)
    h1 = jnp.tanh(
        jnp.dot(x, w1_ref[...], preferred_element_type=jnp.float32) + b1_ref[...]
    )                                                         # (M, 128) = [critic | actor]
    h2 = jnp.tanh(
        jnp.dot(h1, w2_ref[...], preferred_element_type=jnp.float32) + b2_ref[...]
    )                                                         # (M, 128) = [hc | ha]
    # fused gate-input projection + value head:
    # columns [ gi_r | gi_z | gi_n | value (col 3H), zero-pad ]
    g = (
        jnp.dot(h2, wg_ref[...], preferred_element_type=jnp.float32) + bg_ref[...]
    )                                                         # (M, 256)
    val_ref[...] = g[:, 3 * H:3 * H + 1]                      # (M, 1) critic value
    g_scratch[...] = g.reshape(T, N, 4 * H)                   # stash gi per step

    # ---- recurrent GRU phase (only h-dependent work) ----
    whh = whh_ref[...]                                        # (64, 192), hoisted
    bhh = jnp.broadcast_to(bhh_ref[...], (N, 3 * H))          # hoisted broadcast

    def step(t, h):
        hx = h * m_ref[t]                                     # (N, 64)
        gh = jnp.dot(hx, whh, preferred_element_type=jnp.float32) + bhh
        gi = g_scratch[t]                                     # (N, 256)
        r = jax.nn.sigmoid(gi[:, 0:H] + gh[:, 0:H])
        z = jax.nn.sigmoid(gi[:, H:2 * H] + gh[:, H:2 * H])
        n = jnp.tanh(gi[:, 2 * H:3 * H] + r * gh[:, 2 * H:3 * H])
        h_new = (1.0 - z) * n + z * hx
        hid_ref[t] = h_new
        return h_new

    h_final = jax.lax.fori_loop(0, T, step, s0_ref[...], unroll=True)
    st_ref[...] = h_final


# ----------------------------------------------------------------------------
# Parameter construction (mirrors MLPBase.__init__ shapes; deterministic).
# ----------------------------------------------------------------------------
def _normc_linear(key, in_dim, out_dim):
    """init_normc_: N(0,1) rows normalized over the input dim; bias = 0.
    Returned pre-transposed to [in, out]."""
    w = jax.random.normal(key, (out_dim, in_dim), dtype=jnp.float32)
    w = w / jnp.sqrt(jnp.sum(w * w, axis=1, keepdims=True))
    b = jnp.zeros((1, out_dim), dtype=jnp.float32)
    return w.T, b


def _orthogonal(key, rows, cols):
    a = jax.random.normal(key, (rows, cols), dtype=jnp.float32)
    q, r = jnp.linalg.qr(a)
    q = q * jnp.sign(jnp.diagonal(r))[None, :]
    return q


def make_params(num_inputs, seed=0):
    keys = jax.random.split(jax.random.PRNGKey(seed), 8)
    wa1, ba1 = _normc_linear(keys[0], num_inputs, HIDDEN)
    wa2, ba2 = _normc_linear(keys[1], HIDDEN, HIDDEN)
    wc1, bc1 = _normc_linear(keys[2], num_inputs, HIDDEN)
    wc2, bc2 = _normc_linear(keys[3], HIDDEN, HIDDEN)
    wcl, bcl = _normc_linear(keys[4], HIDDEN, 1)
    # GRUCell: weight_ih / weight_hh are (3*64, 64), orthogonal; biases zero.
    wih = _orthogonal(keys[5], 3 * HIDDEN, HIDDEN).T      # (64, 192), gates r,z,n
    whh = _orthogonal(keys[6], 3 * HIDDEN, HIDDEN).T      # (64, 192)
    bih = jnp.zeros((1, 3 * HIDDEN), dtype=jnp.float32)
    bhh = jnp.zeros((1, 3 * HIDDEN), dtype=jnp.float32)
    return dict(wc1=wc1, bc1=bc1, wc2=wc2, bc2=bc2,
                wa1=wa1, ba1=ba1, wa2=wa2, ba2=ba2,
                wcl=wcl, bcl=bcl,
                wih=wih, bih=bih, whh=whh, bhh=bhh)


def pack_params(p):
    """Pack module weights into the fused 128/256-wide kernel layout."""
    H = HIDDEN
    z = jnp.zeros((H, H), jnp.float32)

    W1 = jnp.concatenate([p["wc1"], p["wa1"]], axis=1)               # (F, 128)
    b1 = jnp.concatenate([p["bc1"], p["ba1"]], axis=1)               # (1, 128)
    W2 = jnp.block([[p["wc2"], z], [z, p["wa2"]]])                   # (128, 128)
    b2 = jnp.concatenate([p["bc2"], p["ba2"]], axis=1)               # (1, 128)

    # Wg: (128, 256), columns [ gi_r | gi_z | gi_n | value(col 0 of last 64) ]
    #   hc rows (0..63): zeros for gates, wcl in column 3H
    #   ha rows (64..127): wih for gates, zeros in value block
    wcl_pad = jnp.concatenate([p["wcl"], jnp.zeros((H, H - 1), jnp.float32)], axis=1)
    top = jnp.concatenate([jnp.zeros((H, 3 * H), jnp.float32), wcl_pad], axis=1)
    bot = jnp.concatenate([p["wih"], jnp.zeros((H, H), jnp.float32)], axis=1)
    Wg = jnp.concatenate([top, bot], axis=0)                         # (128, 256)
    bcl_pad = jnp.concatenate([p["bcl"], jnp.zeros((1, H - 1), jnp.float32)], axis=1)
    bg = jnp.concatenate([p["bih"], bcl_pad], axis=1)                # (1, 256)

    return dict(W1=W1, b1=b1, W2=W2, b2=b2, Wg=Wg, bg=bg,
                Whh=p["whh"], bhh=p["bhh"])


# ----------------------------------------------------------------------------
# Wrapper: single pallas_call for the whole (possibly multi-step) rollout.
# ----------------------------------------------------------------------------
@jax.jit
def _mlpbase_rollout(x, m_t, states, pp):
    M, F = x.shape
    T, N, _ = m_t.shape
    H = HIDDEN
    c2 = lambda i: (0, 0)
    c3 = lambda i: (0, 0, 0)
    out_shapes = (
        jax.ShapeDtypeStruct((M, 1), jnp.float32),       # critic value
        jax.ShapeDtypeStruct((T, N, H), jnp.float32),    # GRU outputs per step
        jax.ShapeDtypeStruct((N, H), jnp.float32),       # final recurrent state
    )
    return pl.pallas_call(
        mlpbase_kernel,
        out_shape=out_shapes,
        grid=(1,),
        in_specs=[
            pl.BlockSpec((M, F), c2),                    # x (all steps at once)
            pl.BlockSpec((T, N, 1), c3),                 # masks
            pl.BlockSpec((N, H), c2),                    # initial state
            pl.BlockSpec((F, 2 * H), c2),                # W1
            pl.BlockSpec((1, 2 * H), c2),                # b1
            pl.BlockSpec((2 * H, 2 * H), c2),            # W2
            pl.BlockSpec((1, 2 * H), c2),                # b2
            pl.BlockSpec((2 * H, 4 * H), c2),            # Wg (gates + value head)
            pl.BlockSpec((1, 4 * H), c2),                # bg
            pl.BlockSpec((H, 3 * H), c2),                # Whh
            pl.BlockSpec((1, 3 * H), c2),                # bhh
        ],
        out_specs=(
            pl.BlockSpec((M, 1), c2),
            pl.BlockSpec((T, N, H), c3),
            pl.BlockSpec((N, H), c2),
        ),
        scratch_shapes=[pltpu.VMEM((T, N, 4 * H), jnp.float32)],   # gi per step
        compiler_params=pltpu.CompilerParams(
            dimension_semantics=("arbitrary",)),
    )(x, m_t, states,
      pp["W1"], pp["b1"], pp["W2"], pp["b2"],
      pp["Wg"], pp["bg"], pp["Whh"], pp["bhh"])


def mlpbase_forward(inputs, states, masks, packed_params):
    """Mirrors MLPBase.forward (use_gru=True).

    inputs: (T*N, num_inputs), states: (N, 64), masks: (T*N, 1).
    Returns (critic_linear(hidden_critic), hidden_actor, states).
    """
    N = states.shape[0]
    B, _ = inputs.shape
    T = B // N
    m_t = masks.reshape(T, N, 1)
    value, hid, states_out = _mlpbase_rollout(inputs, m_t, states, packed_params)
    hidden_actor = hid.reshape(B, HIDDEN)
    return value, hidden_actor, states_out


# ----------------------------------------------------------------------------
# Pure-JAX reference (unpacked weights) for correctness checks.
# ----------------------------------------------------------------------------
def reference_step(x, states, masks, p):
    hc = jnp.tanh(x @ p["wc1"] + p["bc1"])
    hc = jnp.tanh(hc @ p["wc2"] + p["bc2"])
    ha = jnp.tanh(x @ p["wa1"] + p["ba1"])
    ha = jnp.tanh(ha @ p["wa2"] + p["ba2"])
    value = hc @ p["wcl"] + p["bcl"]
    hx = states * masks
    gi = ha @ p["wih"] + p["bih"]
    gh = hx @ p["whh"] + p["bhh"]
    r = jax.nn.sigmoid(gi[:, :64] + gh[:, :64])
    z = jax.nn.sigmoid(gi[:, 64:128] + gh[:, 64:128])
    n = jnp.tanh(gi[:, 128:] + r * gh[:, 128:])
    h = (1 - z) * n + z * hx
    return value, h, h


def reference_forward(inputs, states, masks, p):
    N = states.shape[0]
    T = inputs.shape[0] // N
    x_t = inputs.reshape(T, N, -1)
    m_t = masks.reshape(T, N, 1)
    vs, hs = [], []
    for i in range(T):
        v, h, states = reference_step(x_t[i], states, m_t[i], p)
        vs.append(v)
        hs.append(h)
    return jnp.concatenate(vs, 0), jnp.concatenate(hs, 0), states


if __name__ == "__main__":
    NUM_INPUTS = 32
    N = 8          # number of parallel environments (states rows)
    T = 4          # rollout length
    B = T * N

    key = jax.random.PRNGKey(0)
    kx, ks, km = jax.random.split(key, 3)
    x = jax.random.normal(kx, (B, NUM_INPUTS), dtype=jnp.float32)
    states = jax.random.normal(ks, (N, HIDDEN), dtype=jnp.float32)
    masks = (jax.random.uniform(km, (B, 1)) > 0.3).astype(jnp.float32)

    params = make_params(NUM_INPUTS, seed=0)
    packed = pack_params(params)

    # multi-step rollout path (T > 1): one pallas_call, fori_loop over time
    value, hidden_actor, new_states = mlpbase_forward(x, states, masks, packed)
    jax.block_until_ready((value, hidden_actor, new_states))

    v_ref, h_ref, s_ref = reference_forward(x, states, masks, params)
    assert value.shape == (B, 1)
    assert hidden_actor.shape == (B, HIDDEN)
    assert new_states.shape == (N, HIDDEN)
    assert jnp.allclose(value, v_ref, atol=1e-4)
    assert jnp.allclose(hidden_actor, h_ref, atol=1e-4)
    assert jnp.allclose(new_states, s_ref, atol=1e-4)

    # single-step path (inputs.shape[0] == states.shape[0]) -> T == 1
    v1, h1, s1 = mlpbase_forward(x[:N], states, masks[:N], packed)
    jax.block_until_ready((v1, h1, s1))
    v1_ref, h1_ref, s1_ref = reference_step(x[:N], states, masks[:N], params)
    assert jnp.allclose(v1, v1_ref, atol=1e-4)
    assert jnp.allclose(h1, h1_ref, atol=1e-4)
    assert jnp.allclose(s1, s1_ref, atol=1e-4)

    print("KERNEL_OK")
</pallas_src>

<mosaic_0001>
module attributes {stable_mosaic.version = 11 : i64} {
  func.func @mlpbase_kernel(%arg0: i32, %arg1: memref<32x32xf32, #tpu.memory_space<vmem>>, %arg2: memref<4x8x1xf32, #tpu.memory_space<vmem>>, %arg3: memref<8x64xf32, #tpu.memory_space<vmem>>, %arg4: memref<32x128xf32, #tpu.memory_space<vmem>>, %arg5: memref<1x128xf32, #tpu.memory_space<vmem>>, %arg6: memref<128x128xf32, #tpu.memory_space<vmem>>, %arg7: memref<1x128xf32, #tpu.memory_space<vmem>>, %arg8: memref<128x256xf32, #tpu.memory_space<vmem>>, %arg9: memref<1x256xf32, #tpu.memory_space<vmem>>, %arg10: memref<64x192xf32, #tpu.memory_space<vmem>>, %arg11: memref<1x192xf32, #tpu.memory_space<vmem>>, %arg12: memref<32x1xf32, #tpu.memory_space<vmem>>, %arg13: memref<4x8x64xf32, #tpu.memory_space<vmem>>, %arg14: memref<8x64xf32, #tpu.memory_space<vmem>>, %arg15: memref<4x8x256xf32, #tpu.memory_space<vmem>>) attributes {dimension_semantics = [#tpu.dimension_semantics<arbitrary>], iteration_bounds = array<i64: 1>, scalar_prefetch = 0 : i64, scratch_operands = 1 : i64, tpu.core_type = #tpu.core_type<tc>, window_params = [{pipeline_mode = #tpu.pipeline_mode<synchronous>, transform_indices = @transform_0, window_bounds = array<i64: 32, 32>}, {pipeline_mode = #tpu.pipeline_mode<synchronous>, transform_indices = @transform_1, window_bounds = array<i64: 4, 8, 1>}, {pipeline_mode = #tpu.pipeline_mode<synchronous>, transform_indices = @transform_2, window_bounds = array<i64: 8, 64>}, {pipeline_mode = #tpu.pipeline_mode<synchronous>, transform_indices = @transform_3, window_bounds = array<i64: 32, 128>}, {pipeline_mode = #tpu.pipeline_mode<synchronous>, transform_indices = @transform_4, window_bounds = array<i64: 1, 128>}, {pipeline_mode = #tpu.pipeline_mode<synchronous>, transform_indices = @transform_5, window_bounds = array<i64: 128, 128>}, {pipeline_mode = #tpu.pipeline_mode<synchronous>, transform_indices = @transform_6, window_bounds = array<i64: 1, 128>}, {pipeline_mode = #tpu.pipeline_mode<synchronous>, transform_indices = @transform_7, window_bounds = array<i64: 128, 256>}, {pipeline_mode = #tpu.pipeline_mode<synchronous>, transform_indices = @transform_8, window_bounds = array<i64: 1, 256>}, {pipeline_mode = #tpu.pipeline_mode<synchronous>, transform_indices = @transform_9, window_bounds = array<i64: 64, 192>}, {pipeline_mode = #tpu.pipeline_mode<synchronous>, transform_indices = @transform_10, window_bounds = array<i64: 1, 192>}, {pipeline_mode = #tpu.pipeline_mode<synchronous>, transform_indices = @transform_11, window_bounds = array<i64: 32, 1>}, {pipeline_mode = #tpu.pipeline_mode<synchronous>, transform_indices = @transform_12, window_bounds = array<i64: 4, 8, 64>}, {pipeline_mode = #tpu.pipeline_mode<synchronous>, transform_indices = @transform_13, window_bounds = array<i64: 8, 64>}]} {
    %c0 = arith.constant 0 : index
    %c0_0 = arith.constant 0 : index
    %0 = vector.load %arg1[%c0, %c0_0] : memref<32x32xf32, #tpu.memory_space<vmem>>, vector<32x32xf32>
    %c0_1 = arith.constant 0 : index
    %c0_2 = arith.constant 0 : index
    %1 = vector.load %arg4[%c0_1, %c0_2] : memref<32x128xf32, #tpu.memory_space<vmem>>, vector<32x128xf32>
    %cst = arith.constant dense<0.000000e+00> : vector<32x128xf32>
    %2 = tpu.matmul %0, %1, %cst {dimension_numbers = #tpu.dot_dimension_numbers<[1], [0], [0], [1], [0, 0, 1, 1], [], []>} : vector<32x32xf32>, vector<32x128xf32>, vector<32x128xf32> -> vector<32x128xf32>
    %c0_3 = arith.constant 0 : index
    %c0_4 = arith.constant 0 : index
    %3 = vector.load %arg5[%c0_3, %c0_4] : memref<1x128xf32, #tpu.memory_space<vmem>>, vector<1x128xf32>
    %4 = vector.broadcast %3 : vector<1x128xf32> to vector<32x128xf32>
    %5 = arith.addf %2, %4 : vector<32x128xf32>
    %6 = math.tanh %5 : vector<32x128xf32>
    %c0_5 = arith.constant 0 : index
    %c0_6 = arith.constant 0 : index
    %7 = vector.load %arg6[%c0_5, %c0_6] : memref<128x128xf32, #tpu.memory_space<vmem>>, vector<128x128xf32>
    %cst_7 = arith.constant dense<0.000000e+00> : vector<32x128xf32>
    %8 = tpu.matmul %6, %7, %cst_7 {dimension_numbers = #tpu.dot_dimension_numbers<[1], [0], [0], [1], [0, 0, 1, 1], [], []>} : vector<32x128xf32>, vector<128x128xf32>, vector<32x128xf32> -> vector<32x128xf32>
    %c0_8 = arith.constant 0 : index
    %c0_9 = arith.constant 0 : index
    %9 = vector.load %arg7[%c0_8, %c0_9] : memref<1x128xf32, #tpu.memory_space<vmem>>, vector<1x128xf32>
    %10 = vector.broadcast %9 : vector<1x128xf32> to vector<32x128xf32>
    %11 = arith.addf %8, %10 : vector<32x128xf32>
    %12 = math.tanh %11 : vector<32x128xf32>
    %c0_10 = arith.constant 0 : index
    %c0_11 = arith.constant 0 : index
    %13 = vector.load %arg8[%c0_10, %c0_11] : memref<128x256xf32, #tpu.memory_space<vmem>>, vector<128x256xf32>
    %cst_12 = arith.constant dense<0.000000e+00> : vector<32x256xf32>
    %14 = tpu.matmul %12, %13, %cst_12 {dimension_numbers = #tpu.dot_dimension_numbers<[1], [0], [0], [1], [0, 0, 1, 1], [], []>} : vector<32x128xf32>, vector<128x256xf32>, vector<32x256xf32> -> vector<32x256xf32>
    %c0_13 = arith.constant 0 : index
    %c0_14 = arith.constant 0 : index
    %15 = vector.load %arg9[%c0_13, %c0_14] : memref<1x256xf32, #tpu.memory_space<vmem>>, vector<1x256xf32>
    %16 = vector.broadcast %15 : vector<1x256xf32> to vector<32x256xf32>
    %17 = arith.addf %14, %16 : vector<32x256xf32>
    %18 = vector.extract_strided_slice %17 {offsets = [0, 192], sizes = [32, 1], strides = [1, 1]} : vector<32x256xf32> to vector<32x1xf32>
    %c0_15 = arith.constant 0 : index
    %c0_16 = arith.constant 0 : index
    %19 = vector.load %arg12[%c0_15, %c0_16] : memref<32x1xf32, #tpu.memory_space<vmem>>, vector<32x1xf32>
    tpu.vector_store %arg12[%c0_15, %c0_16], %18 {strides = array<i32>} : memref<32x1xf32, #tpu.memory_space<vmem>>, vector<32x1xf32>,
    %20 = vector.shape_cast %17 : vector<32x256xf32> to vector<4x8x256xf32>
    %c0_17 = arith.constant 0 : index
    %c0_18 = arith.constant 0 : index
    %c0_19 = arith.constant 0 : index
    %21 = vector.load %arg15[%c0_17, %c0_18, %c0_19] : memref<4x8x256xf32, #tpu.memory_space<vmem>>, vector<4x8x256xf32>
    tpu.vector_store %arg15[%c0_17, %c0_18, %c0_19], %20 {strides = array<i32>} : memref<4x8x256xf32, #tpu.memory_space<vmem>>, vector<4x8x256xf32>,
    %c0_20 = arith.constant 0 : index
    %c0_21 = arith.constant 0 : index
    %22 = vector.load %arg10[%c0_20, %c0_21] : memref<64x192xf32, #tpu.memory_space<vmem>>, vector<64x192xf32>
    %c0_22 = arith.constant 0 : index
    %c0_23 = arith.constant 0 : index
    %23 = vector.load %arg11[%c0_22, %c0_23] : memref<1x192xf32, #tpu.memory_space<vmem>>, vector<1x192xf32>
    %24 = vector.shape_cast %23 : vector<1x192xf32> to vector<1x192xf32>
    %25 = vector.broadcast %24 : vector<1x192xf32> to vector<8x192xf32>
    %c0_24 = arith.constant 0 : index
    %c0_25 = arith.constant 0 : index
    %26 = vector.load %arg3[%c0_24, %c0_25] : memref<8x64xf32, #tpu.memory_space<vmem>>, vector<8x64xf32>
    %c0_i32 = arith.constant 0 : i32
    %27 = arith.index_cast %c0_i32 : i32 to index
    %c0_26 = arith.constant 0 : index
    %c0_27 = arith.constant 0 : index
    %28 = vector.load %arg2[%27, %c0_26, %c0_27] : memref<4x8x1xf32, #tpu.memory_space<vmem>>, vector<1x8x1xf32>
    %29 = vector.shape_cast %28 : vector<1x8x1xf32> to vector<8x1xf32>
    %30 = vector.broadcast %29 : vector<8x1xf32> to vector<8x64xf32>
    %31 = arith.mulf %26, %30 : vector<8x64xf32>
    %cst_28 = arith.constant dense<0.000000e+00> : vector<8x192xf32>
    %32 = tpu.matmul %31, %22, %cst_28 {dimension_numbers = #tpu.dot_dimension_numbers<[1], [0], [0], [1], [0, 0, 1, 1], [], []>} : vector<8x64xf32>, vector<64x192xf32>, vector<8x192xf32> -> vector<8x192xf32>
    %33 = arith.addf %32, %25 : vector<8x192xf32>
    %34 = arith.index_cast %c0_i32 : i32 to index
    %c0_29 = arith.constant 0 : index
    %c0_30 = arith.constant 0 : index
    %35 = vector.load %arg15[%34, %c0_29, %c0_30] : memref<4x8x256xf32, #tpu.memory_space<vmem>>, vector<1x8x256xf32>
    %36 = vector.shape_cast %35 : vector<1x8x256xf32> to vector<8x256xf32>
    %37 = vector.extract_strided_slice %36 {offsets = [0, 0], sizes = [8, 64], strides = [1, 1]} : vector<8x256xf32> to vector<8x64xf32>
    %38 = vector.extract_strided_slice %33 {offsets = [0, 0], sizes = [8, 64], strides = [1, 1]} : vector<8x192xf32> to vector<8x64xf32>
    %39 = arith.addf %37, %38 : vector<8x64xf32>
    %40 = arith.negf %39 : vector<8x64xf32>
    %41 = math.exp %40 : vector<8x64xf32>
    %cst_31 = arith.constant 1.000000e+00 : f32
    %42 = vector.broadcast %cst_31 : f32 to vector<8x64xf32>
    %43 = arith.addf %42, %41 : vector<8x64xf32>
    %44 = arith.divf %42, %43 : vector<8x64xf32>
    %45 = vector.extract_strided_slice %36 {offsets = [0, 64], sizes = [8, 64], strides = [1, 1]} : vector<8x256xf32> to vector<8x64xf32>
    %46 = vector.extract_strided_slice %33 {offsets = [0, 64], sizes = [8, 64], strides = [1, 1]} : vector<8x192xf32> to vector<8x64xf32>
    %47 = arith.addf %45, %46 : vector<8x64xf32>
    %48 = arith.negf %47 : vector<8x64xf32>
    %49 = math.exp %48 : vector<8x64xf32>
    %cst_32 = arith.constant 1.000000e+00 : f32
    %50 = vector.broadcast %cst_32 : f32 to vector<8x64xf32>
    %51 = arith.addf %50, %49 : vector<8x64xf32>
    %52 = arith.divf %50, %51 : vector<8x64xf32>
    %53 = vector.extract_strided_slice %36 {offsets = [0, 128], sizes = [8, 64], strides = [1, 1]} : vector<8x256xf32> to vector<8x64xf32>
    %54 = vector.extract_strided_slice %33 {offsets = [0, 128], sizes = [8, 64], strides = [1, 1]} : vector<8x192xf32> to vector<8x64xf32>
    %55 = arith.mulf %44, %54 : vector<8x64xf32>
    %56 = arith.addf %53, %55 : vector<8x64xf32>
    %57 = math.tanh %56 : vector<8x64xf32>
    %cst_33 = arith.constant 1.000000e+00 : f32
    %58 = vector.broadcast %cst_33 : f32 to vector<8x64xf32>
    %59 = arith.subf %58, %52 : vector<8x64xf32>
    %60 = arith.mulf %59, %57 : vector<8x64xf32>
    %61 = arith.mulf %52, %31 : vector<8x64xf32>
    %62 = arith.addf %60, %61 : vector<8x64xf32>
    %63 = arith.index_cast %c0_i32 : i32 to index
    %c0_34 = arith.constant 0 : index
    %c0_35 = arith.constant 0 : index
    %64 = vector.load %arg13[%63, %c0_34, %c0_35] : memref<4x8x64xf32, #tpu.memory_space<vmem>>, vector<1x8x64xf32>
    %65 = vector.shape_cast %64 : vector<1x8x64xf32> to vector<8x64xf32>
    %66 = vector.shape_cast %62 : vector<8x64xf32> to vector<1x8x64xf32>
    tpu.vector_store %arg13[%63, %c0_34, %c0_35], %66 {strides = array<i32>} : memref<4x8x64xf32, #tpu.memory_space<vmem>>, vector<1x8x64xf32>,
    %c1_i32 = arith.constant 1 : i32
    %67 = arith.index_cast %c1_i32 : i32 to index
    %c0_36 = arith.constant 0 : index
    %c0_37 = arith.constant 0 : index
    %68 = vector.load %arg2[%67, %c0_36, %c0_37] : memref<4x8x1xf32, #tpu.memory_space<vmem>>, vector<1x8x1xf32>
    %69 = vector.shape_cast %68 : vector<1x8x1xf32> to vector<8x1xf32>
    %70 = vector.broadcast %69 : vector<8x1xf32> to vector<8x64xf32>
    %71 = arith.mulf %62, %70 : vector<8x64xf32>
    %cst_38 = arith.constant dense<0.000000e+00> : vector<8x192xf32>
    %72 = tpu.matmul %71, %22, %cst_38 {dimension_numbers = #tpu.dot_dimension_numbers<[1], [0], [0], [1], [0, 0, 1, 1], [], []>} : vector<8x64xf32>, vector<64x192xf32>, vector<8x192xf32> -> vector<8x192xf32>
    %73 = arith.addf %72, %25 : vector<8x192xf32>
    %74 = arith.index_cast %c1_i32 : i32 to index
    %c0_39 = arith.constant 0 : index
    %c0_40 = arith.constant 0 : index
    %75 = vector.load %arg15[%74, %c0_39, %c0_40] : memref<4x8x256xf32, #tpu.memory_space<vmem>>, vector<1x8x256xf32>
    %76 = vector.shape_cast %75 : vector<1x8x256xf32> to vector<8x256xf32>
    %77 = vector.extract_strided_slice %76 {offsets = [0, 0], sizes = [8, 64], strides = [1, 1]} : vector<8x256xf32> to vector<8x64xf32>
    %78 = vector.extract_strided_slice %73 {offsets = [0, 0], sizes = [8, 64], strides = [1, 1]} : vector<8x192xf32> to vector<8x64xf32>
    %79 = arith.addf %77, %78 : vector<8x64xf32>
    %80 = arith.negf %79 : vector<8x64xf32>
    %81 = math.exp %80 : vector<8x64xf32>
    %cst_41 = arith.constant 1.000000e+00 : f32
    %82 = vector.broadcast %cst_41 : f32 to vector<8x64xf32>
    %83 = arith.addf %82, %81 : vector<8x64xf32>
    %84 = arith.divf %82, %83 : vector<8x64xf32>
    %85 = vector.extract_strided_slice %76 {offsets = [0, 64], sizes = [8, 64], strides = [1, 1]} : vector<8x256xf32> to vector<8x64xf32>
    %86 = vector.extract_strided_slice %73 {offsets = [0, 64], sizes = [8, 64], strides = [1, 1]} : vector<8x192xf32> to vector<8x64xf32>
    %87 = arith.addf %85, %86 : vector<8x64xf32>
    %88 = arith.negf %87 : vector<8x64xf32>
    %89 = math.exp %88 : vector<8x64xf32>
    %cst_42 = arith.constant 1.000000e+00 : f32
    %90 = vector.broadcast %cst_42 : f32 to vector<8x64xf32>
    %91 = arith.addf %90, %89 : vector<8x64xf32>
    %92 = arith.divf %90, %91 : vector<8x64xf32>
    %93 = vector.extract_strided_slice %76 {offsets = [0, 128], sizes = [8, 64], strides = [1, 1]} : vector<8x256xf32> to vector<8x64xf32>
    %94 = vector.extract_strided_slice %73 {offsets = [0, 128], sizes = [8, 64], strides = [1, 1]} : vector<8x192xf32> to vector<8x64xf32>
    %95 = arith.mulf %84, %94 : vector<8x64xf32>
    %96 = arith.addf %93, %95 : vector<8x64xf32>
    %97 = math.tanh %96 : vector<8x64xf32>
    %cst_43 = arith.constant 1.000000e+00 : f32
    %98 = vector.broadcast %cst_43 : f32 to vector<8x64xf32>
    %99 = arith.subf %98, %92 : vector<8x64xf32>
    %100 = arith.mulf %99, %97 : vector<8x64xf32>
    %101 = arith.mulf %92, %71 : vector<8x64xf32>
    %102 = arith.addf %100, %101 : vector<8x64xf32>
    %103 = arith.index_cast %c1_i32 : i32 to index
    %c0_44 = arith.constant 0 : index
    %c0_45 = arith.constant 0 : index
    %104 = vector.load %arg13[%103, %c0_44, %c0_45] : memref<4x8x64xf32, #tpu.memory_space<vmem>>, vector<1x8x64xf32>
    %105 = vector.shape_cast %104 : vector<1x8x64xf32> to vector<8x64xf32>
    %106 = vector.shape_cast %102 : vector<8x64xf32> to vector<1x8x64xf32>
    tpu.vector_store %arg13[%103, %c0_44, %c0_45], %106 {strides = array<i32>} : memref<4x8x64xf32, #tpu.memory_space<vmem>>, vector<1x8x64xf32>,
    %c2_i32 = arith.constant 2 : i32
    %107 = arith.index_cast %c2_i32 : i32 to index
    %c0_46 = arith.constant 0 : index
    %c0_47 = arith.constant 0 : index
    %108 = vector.load %arg2[%107, %c0_46, %c0_47] : memref<4x8x1xf32, #tpu.memory_space<vmem>>, vector<1x8x1xf32>
    %109 = vector.shape_cast %108 : vector<1x8x1xf32> to vector<8x1xf32>
    %110 = vector.broadcast %109 : vector<8x1xf32> to vector<8x64xf32>
    %111 = arith.mulf %102, %110 : vector<8x64xf32>
    %cst_48 = arith.constant dense<0.000000e+00> : vector<8x192xf32>
    %112 = tpu.matmul %111, %22, %cst_48 {dimension_numbers = #tpu.dot_dimension_numbers<[1], [0], [0], [1], [0, 0, 1, 1], [], []>} : vector<8x64xf32>, vector<64x192xf32>, vector<8x192xf32> -> vector<8x192xf32>
    %113 = arith.addf %112, %25 : vector<8x192xf32>
    %114 = arith.index_cast %c2_i32 : i32 to index
    %c0_49 = arith.constant 0 : index
    %c0_50 = arith.constant 0 : index
    %115 = vector.load %arg15[%114, %c0_49, %c0_50] : memref<4x8x256xf32, #tpu.memory_space<vmem>>, vector<1x8x256xf32>
    %116 = vector.shape_cast %115 : vector<1x8x256xf32> to vector<8x256xf32>
    %117 = vector.extract_strided_slice %116 {offsets = [0, 0], sizes = [8, 64], strides = [1, 1]} : vector<8x256xf32> to vector<8x64xf32>
    %118 = vector.extract_strided_slice %113 {offsets = [0, 0], sizes = [8, 64], strides = [1, 1]} : vector<8x192xf32> to vector<8x64xf32>
    %119 = arith.addf %117, %118 : vector<8x64xf32>
    %120 = arith.negf %119 : vector<8x64xf32>
    %121 = math.exp %120 : vector<8x64xf32>
    %cst_51 = arith.constant 1.000000e+00 : f32
    %122 = vector.broadcast %cst_51 : f32 to vector<8x64xf32>
    %123 = arith.addf %122, %121 : vector<8x64xf32>
    %124 = arith.divf %122, %123 : vector<8x64xf32>
    %125 = vector.extract_strided_slice %116 {offsets = [0, 64], sizes = [8, 64], strides = [1, 1]} : vector<8x256xf32> to vector<8x64xf32>
    %126 = vector.extract_strided_slice %113 {offsets = [0, 64], sizes = [8, 64], strides = [1, 1]} : vector<8x192xf32> to vector<8x64xf32>
    %127 = arith.addf %125, %126 : vector<8x64xf32>
    %128 = arith.negf %127 : vector<8x64xf32>
    %129 = math.exp %128 : vector<8x64xf32>
    %cst_52 = arith.constant 1.000000e+00 : f32
    %130 = vector.broadcast %cst_52 : f32 to vector<8x64xf32>
    %131 = arith.addf %130, %129 : vector<8x64xf32>
    %132 = arith.divf %130, %131 : vector<8x64xf32>
    %133 = vector.extract_strided_slice %116 {offsets = [0, 128], sizes = [8, 64], strides = [1, 1]} : vector<8x256xf32> to vector<8x64xf32>
    %134 = vector.extract_strided_slice %113 {offsets = [0, 128], sizes = [8, 64], strides = [1, 1]} : vector<8x192xf32> to vector<8x64xf32>
    %135 = arith.mulf %124, %134 : vector<8x64xf32>
    %136 = arith.addf %133, %135 : vector<8x64xf32>
    %137 = math.tanh %136 : vector<8x64xf32>
    %cst_53 = arith.constant 1.000000e+00 : f32
    %138 = vector.broadcast %cst_53 : f32 to vector<8x64xf32>
    %139 = arith.subf %138, %132 : vector<8x64xf32>
    %140 = arith.mulf %139, %137 : vector<8x64xf32>
    %141 = arith.mulf %132, %111 : vector<8x64xf32>
    %142 = arith.addf %140, %141 : vector<8x64xf32>
    %143 = arith.index_cast %c2_i32 : i32 to index
    %c0_54 = arith.constant 0 : index
    %c0_55 = arith.constant 0 : index
    %144 = vector.load %arg13[%143, %c0_54, %c0_55] : memref<4x8x64xf32, #tpu.memory_space<vmem>>, vector<1x8x64xf32>
    %145 = vector.shape_cast %144 : vector<1x8x64xf32> to vector<8x64xf32>
    %146 = vector.shape_cast %142 : vector<8x64xf32> to vector<1x8x64xf32>
    tpu.vector_store %arg13[%143, %c0_54, %c0_55], %146 {strides = array<i32>} : memref<4x8x64xf32, #tpu.memory_space<vmem>>, vector<1x8x64xf32>,
    %c3_i32 = arith.constant 3 : i32
    %147 = arith.index_cast %c3_i32 : i32 to index
    %c0_56 = arith.constant 0 : index
    %c0_57 = arith.constant 0 : index
    %148 = vector.load %arg2[%147, %c0_56, %c0_57] : memref<4x8x1xf32, #tpu.memory_space<vmem>>, vector<1x8x1xf32>
    %149 = vector.shape_cast %148 : vector<1x8x1xf32> to vector<8x1xf32>
    %150 = vector.broadcast %149 : vector<8x1xf32> to vector<8x64xf32>
    %151 = arith.mulf %142, %150 : vector<8x64xf32>
    %cst_58 = arith.constant dense<0.000000e+00> : vector<8x192xf32>
    %152 = tpu.matmul %151, %22, %cst_58 {dimension_numbers = #tpu.dot_dimension_numbers<[1], [0], [0], [1], [0, 0, 1, 1], [], []>} : vector<8x64xf32>, vector<64x192xf32>, vector<8x192xf32> -> vector<8x192xf32>
    %153 = arith.addf %152, %25 : vector<8x192xf32>
    %154 = arith.index_cast %c3_i32 : i32 to index
    %c0_59 = arith.constant 0 : index
    %c0_60 = arith.constant 0 : index
    %155 = vector.load %arg15[%154, %c0_59, %c0_60] : memref<4x8x256xf32, #tpu.memory_space<vmem>>, vector<1x8x256xf32>
    %156 = vector.shape_cast %155 : vector<1x8x256xf32> to vector<8x256xf32>
    %157 = vector.extract_strided_slice %156 {offsets = [0, 0], sizes = [8, 64], strides = [1, 1]} : vector<8x256xf32> to vector<8x64xf32>
    %158 = vector.extract_strided_slice %153 {offsets = [0, 0], sizes = [8, 64], strides = [1, 1]} : vector<8x192xf32> to vector<8x64xf32>
    %159 = arith.addf %157, %158 : vector<8x64xf32>
    %160 = arith.negf %159 : vector<8x64xf32>
    %161 = math.exp %160 : vector<8x64xf32>
    %cst_61 = arith.constant 1.000000e+00 : f32
    %162 = vector.broadcast %cst_61 : f32 to vector<8x64xf32>
    %163 = arith.addf %162, %161 : vector<8x64xf32>
    %164 = arith.divf %162, %163 : vector<8x64xf32>
    %165 = vector.extract_strided_slice %156 {offsets = [0, 64], sizes = [8, 64], strides = [1, 1]} : vector<8x256xf32> to vector<8x64xf32>
    %166 = vector.extract_strided_slice %153 {offsets = [0, 64], sizes = [8, 64], strides = [1, 1]} : vector<8x192xf32> to vector<8x64xf32>
    %167 = arith.addf %165, %166 : vector<8x64xf32>
    %168 = arith.negf %167 : vector<8x64xf32>
    %169 = math.exp %168 : vector<8x64xf32>
    %cst_62 = arith.constant 1.000000e+00 : f32
    %170 = vector.broadcast %cst_62 : f32 to vector<8x64xf32>
    %171 = arith.addf %170, %169 : vector<8x64xf32>
    %172 = arith.divf %170, %171 : vector<8x64xf32>
    %173 = vector.extract_strided_slice %156 {offsets = [0, 128], sizes = [8, 64], strides = [1, 1]} : vector<8x256xf32> to vector<8x64xf32>
    %174 = vector.extract_strided_slice %153 {offsets = [0, 128], sizes = [8, 64], strides = [1, 1]} : vector<8x192xf32> to vector<8x64xf32>
    %175 = arith.mulf %164, %174 : vector<8x64xf32>
    %176 = arith.addf %173, %175 : vector<8x64xf32>
    %177 = math.tanh %176 : vector<8x64xf32>
    %cst_63 = arith.constant 1.000000e+00 : f32
    %178 = vector.broadcast %cst_63 : f32 to vector<8x64xf32>
    %179 = arith.subf %178, %172 : vector<8x64xf32>
    %180 = arith.mulf %179, %177 : vector<8x64xf32>
    %181 = arith.mulf %172, %151 : vector<8x64xf32>
    %182 = arith.addf %180, %181 : vector<8x64xf32>
    %183 = arith.index_cast %c3_i32 : i32 to index
    %c0_64 = arith.constant 0 : index
    %c0_65 = arith.constant 0 : index
    %184 = vector.load %arg13[%183, %c0_64, %c0_65] : memref<4x8x64xf32, #tpu.memory_space<vmem>>, vector<1x8x64xf32>
    %185 = vector.shape_cast %184 : vector<1x8x64xf32> to vector<8x64xf32>
    %186 = vector.shape_cast %182 : vector<8x64xf32> to vector<1x8x64xf32>
    tpu.vector_store %arg13[%183, %c0_64, %c0_65], %186 {strides = array<i32>} : memref<4x8x64xf32, #tpu.memory_space<vmem>>, vector<1x8x64xf32>,
    %c4_i32 = arith.constant 4 : i32
    %c0_66 = arith.constant 0 : index
    %c0_67 = arith.constant 0 : index
    %187 = vector.load %arg14[%c0_66, %c0_67] : memref<8x64xf32, #tpu.memory_space<vmem>>, vector<8x64xf32>
    tpu.vector_store %arg14[%c0_66, %c0_67], %182 {strides = array<i32>} : memref<8x64xf32, #tpu.memory_space<vmem>>, vector<8x64xf32>,
    return
  }
  func.func @transform_0(%arg0: i32) -> (i32, i32) {
    %c0_i32 = arith.constant 0 : i32
    %c0_i32_0 = arith.constant 0 : i32
    %c0_i32_1 = arith.constant 0 : i32
    return %c0_i32, %c0_i32_0 : i32, i32
  }
  func.func @transform_1(%arg0: i32) -> (i32, i32, i32) {
    %c0_i32 = arith.constant 0 : i32
    %c0_i32_0 = arith.constant 0 : i32
    %c0_i32_1 = arith.constant 0 : i32
    %c0_i32_2 = arith.constant 0 : i32
    return %c0_i32, %c0_i32_0, %c0_i32_1 : i32, i32, i32
  }
  func.func @transform_2(%arg0: i32) -> (i32, i32) {
    %c0_i32 = arith.constant 0 : i32
    %c0_i32_0 = arith.constant 0 : i32
    %c0_i32_1 = arith.constant 0 : i32
    return %c0_i32, %c0_i32_0 : i32, i32
  }
  func.func @transform_3(%arg0: i32) -> (i32, i32) {
    %c0_i32 = arith.constant 0 : i32
    %c0_i32_0 = arith.constant 0 : i32
    %c0_i32_1 = arith.constant 0 : i32
    return %c0_i32, %c0_i32_0 : i32, i32
  }
  func.func @transform_4(%arg0: i32) -> (i32, i32) {
    %c0_i32 = arith.constant 0 : i32
    %c0_i32_0 = arith.constant 0 : i32
    %c0_i32_1 = arith.constant 0 : i32
    return %c0_i32, %c0_i32_0 : i32, i32
  }
  func.func @transform_5(%arg0: i32) -> (i32, i32) {
    %c0_i32 = arith.constant 0 : i32
    %c0_i32_0 = arith.constant 0 : i32
    %c0_i32_1 = arith.constant 0 : i32
    return %c0_i32, %c0_i32_0 : i32, i32
  }
  func.func @transform_6(%arg0: i32) -> (i32, i32) {
    %c0_i32 = arith.constant 0 : i32
    %c0_i32_0 = arith.constant 0 : i32
    %c0_i32_1 = arith.constant 0 : i32
    return %c0_i32, %c0_i32_0 : i32, i32
  }
  func.func @transform_7(%arg0: i32) -> (i32, i32) {
    %c0_i32 = arith.constant 0 : i32
    %c0_i32_0 = arith.constant 0 : i32
    %c0_i32_1 = arith.constant 0 : i32
    return %c0_i32, %c0_i32_0 : i32, i32
  }
  func.func @transform_8(%arg0: i32) -> (i32, i32) {
    %c0_i32 = arith.constant 0 : i32
    %c0_i32_0 = arith.constant 0 : i32
    %c0_i32_1 = arith.constant 0 : i32
    return %c0_i32, %c0_i32_0 : i32, i32
  }
  func.func @transform_9(%arg0: i32) -> (i32, i32) {
    %c0_i32 = arith.constant 0 : i32
    %c0_i32_0 = arith.constant 0 : i32
    %c0_i32_1 = arith.constant 0 : i32
    return %c0_i32, %c0_i32_0 : i32, i32
  }
  func.func @transform_10(%arg0: i32) -> (i32, i32) {
    %c0_i32 = arith.constant 0 : i32
    %c0_i32_0 = arith.constant 0 : i32
    %c0_i32_1 = arith.constant 0 : i32
    return %c0_i32, %c0_i32_0 : i32, i32
  }
  func.func @transform_11(%arg0: i32) -> (i32, i32) {
    %c0_i32 = arith.constant 0 : i32
    %c0_i32_0 = arith.constant 0 : i32
    %c0_i32_1 = arith.constant 0 : i32
    return %c0_i32, %c0_i32_0 : i32, i32
  }
  func.func @transform_12(%arg0: i32) -> (i32, i32, i32) {
    %c0_i32 = arith.constant 0 : i32
    %c0_i32_0 = arith.constant 0 : i32
    %c0_i32_1 = arith.constant 0 : i32
    %c0_i32_2 = arith.constant 0 : i32
    return %c0_i32, %c0_i32_0, %c0_i32_1 : i32, i32, i32
  }
  func.func @transform_13(%arg0: i32) -> (i32, i32) {
    %c0_i32 = arith.constant 0 : i32
    %c0_i32_0 = arith.constant 0 : i32
    %c0_i32_1 = arith.constant 0 : i32
    return %c0_i32, %c0_i32_0 : i32, i32
  }
}

</mosaic_0001>

<llo_original>
// kernel: _mlpbase_rollout.1
$region0: #{_mlpbase_rollout.1}
  #allocation0 [shape = 'u32[]', space=smem, size = 0x4, offset = 0x4, fixed_abs, tag = 'smem constant byte address 0x4 - core index']
  #allocation1 [shape = 'u32[72,128]{1,0:T(1,128)}', space=vmem, size = 0x9000, scoped, tag = 'internal scratch']
  #allocation2 [shape = 'f32[4,8,256]{2,1,0:T(8,128)}', space=vmem, size = 0x8000, scoped, tag = 'scratch operand']
  %s0 = inlined_call_operand.vmem [shape: f32[32,32], index: 0, kind: input, shape index: {}]
  %s1 = inlined_call_operand.vmem [shape: f32[4,8,1], index: 1, kind: input, shape index: {}]
  %s2 = inlined_call_operand.hbm [shape: f32[8,64], index: 2, kind: input, shape index: {}]
  %s3 = inlined_call_operand.hbm [shape: f32[32,128], index: 3, kind: input, shape index: {}]
  %s4 = inlined_call_operand.vmem [shape: f32[1,128], index: 4, kind: input, shape index: {}]
  %s5 = inlined_call_operand.hbm [shape: f32[128,128], index: 5, kind: input, shape index: {}]
  %s6 = inlined_call_operand.vmem [shape: f32[1,128], index: 6, kind: input, shape index: {}]
  %s7 = inlined_call_operand.hbm [shape: f32[128,256], index: 7, kind: input, shape index: {}]
  %s8 = inlined_call_operand.vmem [shape: f32[1,256], index: 8, kind: input, shape index: {}]
  %s9 = inlined_call_operand.hbm [shape: f32[64,192], index: 9, kind: input, shape index: {}]
  %s10 = inlined_call_operand.vmem [shape: f32[1,192], index: 10, kind: input, shape index: {}]
  %s11 = inlined_call_operand.vmem [shape: f32[32,1], index: 11, kind: output, shape index: {0}]
  %s12 = inlined_call_operand.hbm [shape: f32[4,8,64], index: 12, kind: output, shape index: {1}]
  %s13 = inlined_call_operand.hbm [shape: f32[8,64], index: 13, kind: output, shape index: {2}]
  %14 = xla_tuple %s11, %s12, %s13
  %s15 = sld [smem:[#allocation0]]
  $region90: #{_mlpbase_rollout.1} parent=0
    _
  %s17 = ssub.s32 1, %s15
  %s18 = scalar_select 0, %s17, %s15
  $region1: #{_mlpbase_rollout.1} parent=0
    #allocation3 [shape = 'u8[4096]{0}', space=vmem, size = 0x1000, scoped, tag = 'input window, operand 2, single buffered']
    #allocation4 [shape = 's32[1]{0}', space=sflag, size = 0x4, scoped, tag = 'scoped memory for _mlpbase_rollout.1']
    #allocation5 [shape = 's32[1]{0}', space=sflag, size = 0x4, scoped, tag = 'scoped memory for _mlpbase_rollout.1']
    #allocation6 [shape = 'u8[16384]{0}', space=vmem, size = 0x4000, scoped, tag = 'input window, operand 3, single buffered']
    #allocation7 [shape = 's32[1]{0}', space=sflag, size = 0x4, scoped, tag = 'scoped memory for _mlpbase_rollout.1']
    #allocation8 [shape = 'u8[65536]{0}', space=vmem, size = 0x10000, scoped, tag = 'input window, operand 5, single buffered']
    #allocation9 [shape = 'u8[131072]{0}', space=vmem, size = 0x20000, scoped, tag = 'input window, operand 7, single buffered']
    #allocation10 [shape = 's32[1]{0}', space=sflag, size = 0x4, scoped, tag = 'scoped memory for _mlpbase_rollout.1']
    #allocation11 [shape = 'u8[65536]{0}', space=vmem, size = 0x10000, scoped, tag = 'input window, operand 9, single buffered']
    #allocation12 [shape = 'u8[16384]{0}', space=vmem, size = 0x4000, scoped, tag = 'output window, operand 1, single buffered']
    #allocation13 [shape = 'u8[4096]{0}', space=vmem, size = 0x1000, scoped, tag = 'output window, operand 2, single buffered']
    #allocation14 [shape = 's32[1]{0}', space=sflag, size = 0x4, scoped, tag = 'scoped memory for _mlpbase_rollout.1']
    %19 = vsyncpa [#allocation4], 0
    %20 = vsyncpa [#allocation7], 0
    %21 = vsyncpa [#allocation10], 0
    %22 = vsyncpa [#allocation5], 0
    %23 = vsyncpa [#allocation14], 0
    // Predicated region
    $region2: #{_mlpbase_rollout.1} parent=1 // pred_check
      _
    $region3: #{_mlpbase_rollout.1} parent=1 // pred_check_branch
      %25 = sbr.rel (0) target = $region5
    $region4: #{_mlpbase_rollout.1} parent=1 // pred_region
      _
    $region5: #{_mlpbase_rollout.1} parent=1 // pred_fallthru
      _
    // Predicated region
    $region6: #{_mlpbase_rollout.1} parent=1 // pred_check
      _
    $region7: #{_mlpbase_rollout.1} parent=1 // pred_check_branch
      %27 = sbr.rel (0) target = $region9
    $region8: #{_mlpbase_rollout.1} parent=1 // pred_region
      _
    $region9: #{_mlpbase_rollout.1} parent=1 // pred_fallthru
      _
    // Predicated region
    $region10: #{_mlpbase_rollout.1} parent=1 // pred_check
      _
    $region11: #{_mlpbase_rollout.1} parent=1 // pred_check_branch
      %29 = sbr.rel (0) target = $region13
    $region12: #{_mlpbase_rollout.1} parent=1 // pred_region
      %31 = vsyncadd [#allocation4], 0
      %s33 = sshll.u32 %s2, 4
      %s34 = int_to_ptr.hbm [resolvable:$true] %s33
      %s35 = sshll.u32 [#allocation3], 4
      %s36 = int_to_ptr.vmem [resolvable:$true] %s35
      %38 = dma.hbm_to_vmem [thread:$0]  %s34, 128, %s36, [#allocation4]
    $region13: #{_mlpbase_rollout.1} parent=1 // pred_fallthru
      _
    // Predicated region
    $region14: #{_mlpbase_rollout.1} parent=1 // pred_check
      _
    $region15: #{_mlpbase_rollout.1} parent=1 // pred_check_branch
      %40 = sbr.rel (0) target = $region17
    $region16: #{_mlpbase_rollout.1} parent=1 // pred_region
      %42 = vsyncadd [#allocation7], 0
      %s43 = sshll.u32 %s3, 4
      %s44 = int_to_ptr.hbm [resolvable:$true] %s43
      %s45 = sshll.u32 [#allocation6], 4
      %s46 = int_to_ptr.vmem [resolvable:$true] %s45
      %51 = dma.hbm_to_vmem [thread:$0]  %s44, 512, %s46, [#allocation7], 128, 128, 8
    $region17: #{_mlpbase_rollout.1} parent=1 // pred_fallthru
      _
    // Predicated region
    $region18: #{_mlpbase_rollout.1} parent=1 // pred_check
      _
    $region19: #{_mlpbase_rollout.1} parent=1 // pred_check_branch
      %53 = sbr.rel (0) target = $region21
    $region20: #{_mlpbase_rollout.1} parent=1 // pred_region
      _
    $region21: #{_mlpbase_rollout.1} parent=1 // pred_fallthru
      _
    // Predicated region
    $region22: #{_mlpbase_rollout.1} parent=1 // pred_check
      _
    $region23: #{_mlpbase_rollout.1} parent=1 // pred_check_branch
      %55 = sbr.rel (0) target = $region25
    $region24: #{_mlpbase_rollout.1} parent=1 // pred_region
      %57 = vsyncadd [#allocation7], 0
      %s58 = sshll.u32 %s5, 4
      %s59 = int_to_ptr.hbm [resolvable:$true] %s58
      %s60 = sshll.u32 [#allocation8], 4
      %s61 = int_to_ptr.vmem [resolvable:$true] %s60
      %66 = dma.hbm_to_vmem [thread:$0]  %s59, 2048, %s61, [#allocation7], 128, 128, 8
    $region25: #{_mlpbase_rollout.1} parent=1 // pred_fallthru
      _
    // Predicated region
    $region26: #{_mlpbase_rollout.1} parent=1 // pred_check
      _
    $region27: #{_mlpbase_rollout.1} parent=1 // pred_check_branch
      %68 = sbr.rel (0) target = $region29
    $region28: #{_mlpbase_rollout.1} parent=1 // pred_region
      _
    $region29: #{_mlpbase_rollout.1} parent=1 // pred_fallthru
      _
    // Predicated region
    $region30: #{_mlpbase_rollout.1} parent=1 // pred_check
      _
    $region31: #{_mlpbase_rollout.1} parent=1 // pred_check_branch
      %70 = sbr.rel (0) target = $region33
    $region32: #{_mlpbase_rollout.1} parent=1 // pred_region
      %72 = vsyncadd [#allocation10], 0
      %s73 = sshll.u32 %s7, 4
      %s74 = int_to_ptr.hbm [resolvable:$true] %s73
      %s75 = sshll.u32 [#allocation9], 4
      %s76 = int_to_ptr.vmem [resolvable:$true] %s75
      %81 = dma.hbm_to_vmem [thread:$0]  %s74, 4096, %s76, [#allocation10], 256, 256, 16
    $region33: #{_mlpbase_rollout.1} parent=1 // pred_fallthru
      _
    // Predicated region
    $region34: #{_mlpbase_rollout.1} parent=1 // pred_check
      _
    $region35: #{_mlpbase_rollout.1} parent=1 // pred_check_branch
      %83 = sbr.rel (0) target = $region37
    $region36: #{_mlpbase_rollout.1} parent=1 // pred_region
      _
    $region37: #{_mlpbase_rollout.1} parent=1 // pred_fallthru
      _
    // Predicated region
    $region38: #{_mlpbase_rollout.1} parent=1 // pred_check
      _
    $region39: #{_mlpbase_rollout.1} parent=1 // pred_check_branch
      %85 = sbr.rel (0) target = $region41
    $region40: #{_mlpbase_rollout.1} parent=1 // pred_region
      %87 = vsyncadd [#allocation10], 0
      %s88 = sshll.u32 %s9, 4
      %s89 = int_to_ptr.hbm [resolvable:$true] %s88
      %s90 = sshll.u32 [#allocation11], 4
      %s91 = int_to_ptr.vmem [resolvable:$true] %s90
      %96 = dma.hbm_to_vmem [thread:$0]  %s89, 2048, %s91, [#allocation10], 256, 256, 16
    $region41: #{_mlpbase_rollout.1} parent=1 // pred_fallthru
      _
    // Predicated region
    $region42: #{_mlpbase_rollout.1} parent=1 // pred_check
      _
    $region43: #{_mlpbase_rollout.1} parent=1 // pred_check_branch
      %98 = sbr.rel (0) target = $region45
    $region44: #{_mlpbase_rollout.1} parent=1 // pred_region
      _
    $region45: #{_mlpbase_rollout.1} parent=1 // pred_fallthru
      _
    // Predicated region
    $region46: #{_mlpbase_rollout.1} parent=1 // pred_check
      _
    $region47: #{_mlpbase_rollout.1} parent=1 // pred_check_branch
      %100 = sbr.rel (0) target = $region49
    $region48: #{_mlpbase_rollout.1} parent=1 // pred_region
      %102 = dma.done [#allocation4], 128
    $region49: #{_mlpbase_rollout.1} parent=1 // pred_fallthru
      _
    // Predicated region
    $region50: #{_mlpbase_rollout.1} parent=1 // pred_check
      _
    $region51: #{_mlpbase_rollout.1} parent=1 // pred_check_branch
      %104 = sbr.rel (0) target = $region53
    $region52: #{_mlpbase_rollout.1} parent=1 // pred_region
      %106 = dma.done [#allocation7], 512
    $region53: #{_mlpbase_rollout.1} parent=1 // pred_fallthru
      _
    // Predicated region
    $region54: #{_mlpbase_rollout.1} parent=1 // pred_check
      _
    $region55: #{_mlpbase_rollout.1} parent=1 // pred_check_branch
      %108 = sbr.rel (0) target = $region57
    $region56: #{_mlpbase_rollout.1} parent=1 // pred_region
      %110 = dma.done [#allocation7], 2048
    $region57: #{_mlpbase_rollout.1} parent=1 // pred_fallthru
      _
    // Predicated region
    $region58: #{_mlpbase_rollout.1} parent=1 // pred_check
      _
    $region59: #{_mlpbase_rollout.1} parent=1 // pred_check_branch
      %112 = sbr.rel (0) target = $region61
    $region60: #{_mlpbase_rollout.1} parent=1 // pred_region
      %114 = dma.done [#allocation10], 4096
    $region61: #{_mlpbase_rollout.1} parent=1 // pred_fallthru
      _
    // Predicated region
    $region62: #{_mlpbase_rollout.1} parent=1 // pred_check
      _
    $region63: #{_mlpbase_rollout.1} parent=1 // pred_check_branch
      %116 = sbr.rel (0) target = $region65
    $region64: #{_mlpbase_rollout.1} parent=1 // pred_region
      %118 = dma.done [#allocation10], 2048
    $region65: #{_mlpbase_rollout.1} parent=1 // pred_fallthru
      _
    %v119 = vld [vmem:[%s0] sm:$0xff]
    %v120 = vld [vmem:[%s0 + $0x8] sm:$0xff]
    %v121 = vld [vmem:[%s0 + $0x10] sm:$0xff]
    %v122 = vld [vmem:[%s0 + $0x18] sm:$0xff]
    %v123 = vld [vmem:[#allocation6] sm:$0xff]
    %v124 = vld [vmem:[#allocation6 + $0x8] sm:$0xff]
    %v125 = vld [vmem:[#allocation6 + $0x10] sm:$0xff]
    %v126 = vld [vmem:[#allocation6 + $0x18] sm:$0xff]
    %v127 = vld [vmem:[%s4] sm:$0x1]
    %v129 = vperm.slane %v127, 0
    %vm131 = vcmask 261120
    %v133 = vsel %vm131, %v119, 0
    %v136 = vsel %vm131, %v120, 0
    %v139 = vsel %vm131, %v121, 0
    %v142 = vsel %vm131, %v122, 0
    %144 = vmatpush.msra.mxu0 0.0
    %145 = vmatpush.msra.mxu0 0.0
    %146 = vmatpush.msra.mxu0 0.0
    %147 = vmatpush.msra.mxu0 0.0
    %148 = vmatpush.msra.mxu0 0.0
    %149 = vmatpush.msra.mxu0 0.0
    %150 = vmatpush.msra.mxu0 0.0
    %151 = vmatpush.msra.mxu0 0.0
    %152 = vmatpush.msra.mxu0 0.0
    %153 = vmatpush.msra.mxu0 0.0
    %154 = vmatpush.msra.mxu0 0.0
    %155 = vmatpush.msra.mxu0 0.0
    %156 = vmatpush.msra.mxu0 %v126
    %157 = vmatpush.msra.mxu0 %v125
    %158 = vmatpush.msra.mxu0 %v124
    %159 = vmatpush.msra.mxu0 %v123
    %160 = vmatmul.f32.gmra.mxu0 %v133
    %v161 = vpop.f32.mrf.mxu0
    %v162 = vadd.f32 %v129, %v161
    %163 = vmatmul.f32.gmra.mxu0 %v136
    %v164 = vpop.f32.mrf.mxu0
    %v165 = vadd.f32 %v129, %v164
    %166 = vmatmul.f32.gmra.mxu0 %v139
    %v167 = vpop.f32.mrf.mxu0
    %v168 = vadd.f32 %v129, %v167
    %169 = vmatmul.f32.gmra.mxu0 %v142
    %v170 = vpop.f32.mrf.mxu0
    %v171 = vadd.f32 %v129, %v170
    %172 = vdwg.mxu0
    %v173 = vtanh.pop %v162
    %v174 = vtanh.pop %v165
    %v175 = vtanh.pop %v168
    %v176 = vtanh.pop %v171
    %v177 = vld [vmem:[#allocation8] sm:$0xff]
    %v178 = vld [vmem:[#allocation8 + $0x8] sm:$0xff]
    %v179 = vld [vmem:[#allocation8 + $0x10] sm:$0xff]
    %v180 = vld [vmem:[#allocation8 + $0x18] sm:$0xff]
    %v181 = vld [vmem:[#allocation8 + $0x20] sm:$0xff]
    %v182 = vld [vmem:[#allocation8 + $0x28] sm:$0xff]
    %v183 = vld [vmem:[#allocation8 + $0x30] sm:$0xff]
    %v184 = vld [vmem:[#allocation8 + $0x38] sm:$0xff]
    %v185 = vld [vmem:[#allocation8 + $0x40] sm:$0xff]
    %v186 = vld [vmem:[#allocation8 + $0x48] sm:$0xff]
    %v187 = vld [vmem:[#allocation8 + $0x50] sm:$0xff]
    %v188 = vld [vmem:[#allocation8 + $0x58] sm:$0xff]
    %v189 = vld [vmem:[#allocation8 + $0x60] sm:$0xff]
    %v190 = vld [vmem:[#allocation8 + $0x68] sm:$0xff]
    %v191 = vld [vmem:[#allocation8 + $0x70] sm:$0xff]
    %v192 = vld [vmem:[#allocation8 + $0x78] sm:$0xff]
    %v193 = vld [vmem:[%s6] sm:$0x1]
    %v195 = vperm.slane %v193, 0
    %197 = vmatpush.msra.mxu0 %v192
    %198 = vmatpush.msra.mxu0 %v191
    %199 = vmatpush.msra.mxu0 %v190
    %200 = vmatpush.msra.mxu0 %v189
    %201 = vmatpush.msra.mxu0 %v188
    %202 = vmatpush.msra.mxu0 %v187
    %203 = vmatpush.msra.mxu0 %v186
    %204 = vmatpush.msra.mxu0 %v185
    %205 = vmatpush.msra.mxu0 %v184
    %206 = vmatpush.msra.mxu0 %v183
    %207 = vmatpush.msra.mxu0 %v182
    %208 = vmatpush.msra.mxu0 %v181
    %209 = vmatpush.msra.mxu0 %v180
    %210 = vmatpush.msra.mxu0 %v179
    %211 = vmatpush.msra.mxu0 %v178
    %212 = vmatpush.msra.mxu0 %v177
    %213 = vmatmul.f32.gmra.mxu0 %v173
    %v214 = vpop.f32.mrf.mxu0
    %v215 = vadd.f32 %v195, %v214
    %216 = vmatmul.f32.gmra.mxu0 %v174
    %v217 = vpop.f32.mrf.mxu0
    %v218 = vadd.f32 %v195, %v217
    %219 = vmatmul.f32.gmra.mxu0 %v175
    %v220 = vpop.f32.mrf.mxu0
    %v221 = vadd.f32 %v195, %v220
    %222 = vmatmul.f32.gmra.mxu0 %v176
    %v223 = vpop.f32.mrf.mxu0
    %v224 = vadd.f32 %v195, %v223
    %225 = vdwg.mxu0
    %v226 = vtanh.pop %v215
    %v227 = vtanh.pop %v218
    %v228 = vtanh.pop %v221
    %v229 = vtanh.pop %v224
    %v230 = vld [vmem:[#allocation9] sm:$0xff]
    %v231 = vld [vmem:[#allocation9 + $0x8] sm:$0xff]
    %v232 = vld [vmem:[#allocation9 + $0x10] sm:$0xff]
    %v233 = vld [vmem:[#allocation9 + $0x18] sm:$0xff]
    %v234 = vld [vmem:[#allocation9 + $0x20] sm:$0xff]
    %v235 = vld [vmem:[#allocation9 + $0x28] sm:$0xff]
    %v236 = vld [vmem:[#allocation9 + $0x30] sm:$0xff]
    %v237 = vld [vmem:[#allocation9 + $0x38] sm:$0xff]
    %v238 = vld [vmem:[#allocation9 + $0x40] sm:$0xff]
    %v239 = vld [vmem:[#allocation9 + $0x48] sm:$0xff]
    %v240 = vld [vmem:[#allocation9 + $0x50] sm:$0xff]
    %v241 = vld [vmem:[#allocation9 + $0x58] sm:$0xff]
    %v242 = vld [vmem:[#allocation9 + $0x60] sm:$0xff]
    %v243 = vld [vmem:[#allocation9 + $0x68] sm:$0xff]
    %v244 = vld [vmem:[#allocation9 + $0x70] sm:$0xff]
    %v245 = vld [vmem:[#allocation9 + $0x78] sm:$0xff]
    %v246 = vld [vmem:[#allocation9 + $0x80] sm:$0xff]
    %v247 = vld [vmem:[#allocation9 + $0x88] sm:$0xff]
    %v248 = vld [vmem:[#allocation9 + $0x90] sm:$0xff]
    %v249 = vld [vmem:[#allocation9 + $0x98] sm:$0xff]
    %v250 = vld [vmem:[#allocation9 + $0xa0] sm:$0xff]
    %v251 = vld [vmem:[#allocation9 + $0xa8] sm:$0xff]
    %v252 = vld [vmem:[#allocation9 + $0xb0] sm:$0xff]
    %v253 = vld [vmem:[#allocation9 + $0xb8] sm:$0xff]
    %v254 = vld [vmem:[#allocation9 + $0xc0] sm:$0xff]
    %v255 = vld [vmem:[#allocation9 + $0xc8] sm:$0xff]
    %v256 = vld [vmem:[#allocation9 + $0xd0] sm:$0xff]
    %v257 = vld [vmem:[#allocation9 + $0xd8] sm:$0xff]
    %v258 = vld [vmem:[#allocation9 + $0xe0] sm:$0xff]
    %v259 = vld [vmem:[#allocation9 + $0xe8] sm:$0xff]
    %v260 = vld [vmem:[#allocation9 + $0xf0] sm:$0xff]
    %v261 = vld [vmem:[#allocation9 + $0xf8] sm:$0xff]
    %v262 = vld [vmem:[%s8] sm:$0x3]
    %v264 = vperm.slane %v262, 0
    %v265 = vperm.slane %v262, 1
    %268 = vmatpush.msra.mxu0 %v260
    %269 = vmatpush.msra.mxu0 %v258
    %270 = vmatpush.msra.mxu0 %v256
    %271 = vmatpush.msra.mxu0 %v254
    %272 = vmatpush.msra.mxu0 %v252
    %273 = vmatpush.msra.mxu0 %v250
    %274 = vmatpush.msra.mxu0 %v248
    %275 = vmatpush.msra.mxu0 %v246
    %276 = vmatpush.msra.mxu0 %v244
    %277 = vmatpush.msra.mxu0 %v242
    %278 = vmatpush.msra.mxu0 %v240
    %279 = vmatpush.msra.mxu0 %v238
    %280 = vmatpush.msra.mxu0 %v236
    %281 = vmatpush.msra.mxu0 %v234
    %282 = vmatpush.msra.mxu0 %v232
    %283 = vmatpush.msra.mxu0 %v230
    %284 = vmatmul.f32.gmra.mxu0 %v226
    %v285 = vpop.f32.mrf.mxu0
    %v286 = vadd.f32 %v264, %v285
    %287 = vmatmul.f32.gmra.mxu0 %v227
    %v288 = vpop.f32.mrf.mxu0
    %v289 = vadd.f32 %v264, %v288
    %290 = vmatmul.f32.gmra.mxu0 %v228
    %v291 = vpop.f32.mrf.mxu0
    %v292 = vadd.f32 %v264, %v291
    %293 = vmatmul.f32.gmra.mxu0 %v229
    %v294 = vpop.f32.mrf.mxu0
    %v295 = vadd.f32 %v264, %v294
    %296 = vdwg.mxu0
    %297 = vmatpush.msra.mxu0 %v261
    %298 = vmatpush.msra.mxu0 %v259
    %299 = vmatpush.msra.mxu0 %v257
    %300 = vmatpush.msra.mxu0 %v255
    %301 = vmatpush.msra.mxu0 %v253
    %302 = vmatpush.msra.mxu0 %v251
    %303 = vmatpush.msra.mxu0 %v249
    %304 = vmatpush.msra.mxu0 %v247
    %305 = vmatpush.msra.mxu0 %v245
    %306 = vmatpush.msra.mxu0 %v243
    %307 = vmatpush.msra.mxu0 %v241
    %308 = vmatpush.msra.mxu0 %v239
    %309 = vmatpush.msra.mxu0 %v237
    %310 = vmatpush.msra.mxu0 %v235
    %311 = vmatpush.msra.mxu0 %v233
    %312 = vmatpush.msra.mxu0 %v231
    %313 = vmatmul.f32.gmra.mxu0 %v226
    %v314 = vpop.f32.mrf.mxu0
    %v315 = vadd.f32 %v265, %v314
    %316 = vmatmul.f32.gmra.mxu0 %v227
    %v317 = vpop.f32.mrf.mxu0
    %v318 = vadd.f32 %v265, %v317
    %319 = vmatmul.f32.gmra.mxu0 %v228
    %v320 = vpop.f32.mrf.mxu0
    %v321 = vadd.f32 %v265, %v320
    %322 = vmatmul.f32.gmra.mxu0 %v229
    %v323 = vpop.f32.mrf.mxu0
    %v324 = vadd.f32 %v265, %v323
    %325 = vdwg.mxu0
    %330 = vrot.lane.b32.xlu0 %v315, 64
    %v331 = vpop.permute.xlu0 %330
    %332 = vrot.lane.b32.xlu0 %v318, 64
    %v333 = vpop.permute.xlu0 %332
    %334 = vrot.lane.b32.xlu0 %v321, 64
    %v335 = vpop.permute.xlu0 %334
    %336 = vrot.lane.b32.xlu0 %v324, 64
    %v337 = vpop.permute.xlu0 %336
    %vm342 = vcmask 7168
    %343 = vst.msk [vmem:[%s11] sm:$0xff] %vm342, %v331
    %344 = vst.msk [vmem:[%s11 + $0x8] sm:$0xff] %vm342, %v333
    %345 = vst.msk [vmem:[%s11 + $0x10] sm:$0xff] %vm342, %v335
    %346 = vst.msk [vmem:[%s11 + $0x18] sm:$0xff] %vm342, %v337
    %347 = vst [vmem:[#allocation2] sm:$0xff] %v286
    %348 = vst [vmem:[#allocation2 + $0x8] sm:$0xff] %v315
    %349 = vst [vmem:[#allocation2 + $0x10] sm:$0xff] %v289
    %350 = vst [vmem:[#allocation2 + $0x18] sm:$0xff] %v318
    %351 = vst [vmem:[#allocation2 + $0x20] sm:$0xff] %v292
    %352 = vst [vmem:[#allocation2 + $0x28] sm:$0xff] %v321
    %353 = vst [vmem:[#allocation2 + $0x30] sm:$0xff] %v295
    %354 = vst [vmem:[#allocation2 + $0x38] sm:$0xff] %v324
    %v355 = vld [vmem:[#allocation11] sm:$0xff]
    %v356 = vld [vmem:[#allocation11 + $0x8] sm:$0xff]
    %v357 = vld [vmem:[#allocation11 + $0x10] sm:$0xff]
    %v358 = vld [vmem:[#allocation11 + $0x18] sm:$0xff]
    %v359 = vld [vmem:[#allocation11 + $0x20] sm:$0xff]
    %v360 = vld [vmem:[#allocation11 + $0x28] sm:$0xff]
    %v361 = vld [vmem:[#allocation11 + $0x30] sm:$0xff]
    %v362 = vld [vmem:[#allocation11 + $0x38] sm:$0xff]
    %v363 = vld [vmem:[#allocation11 + $0x40] sm:$0xff]
    %v364 = vld [vmem:[#allocation11 + $0x48] sm:$0xff]
    %v365 = vld [vmem:[#allocation11 + $0x50] sm:$0xff]
    %v366 = vld [vmem:[#allocation11 + $0x58] sm:$0xff]
    %v367 = vld [vmem:[#allocation11 + $0x60] sm:$0xff]
    %v368 = vld [vmem:[#allocation11 + $0x68] sm:$0xff]
    %v369 = vld [vmem:[#allocation11 + $0x70] sm:$0xff]
    %v370 = vld [vmem:[#allocation11 + $0x78] sm:$0xff]
    %v371 = vld [vmem:[%s10] sm:$0x3]
    %v373 = vperm.slane %v371, 0
    %v374 = vperm.slane %v371, 1
    %v377 = vld [vmem:[#allocation3] sm:$0xff]
    %v378 = vld [vmem:[%s1] sm:$0xff]
    %380 = vset.pattern.permute.xlu0 0
    %381 = vperm.xlu0 %380, %v378
    %v382 = vpop.permute.xlu0 %381
    %v384 = vmul.f32 %v377, %v382
    %vm385 = vcmask 523264
    %v387 = vsel %vm385, %v384, 0
    %389 = vmatpush.msra.mxu0 0.0
    %390 = vmatpush.msra.mxu0 0.0
    %391 = vmatpush.msra.mxu0 0.0
    %392 = vmatpush.msra.mxu0 0.0
    %393 = vmatpush.msra.mxu0 0.0
    %394 = vmatpush.msra.mxu0 0.0
    %395 = vmatpush.msra.mxu0 0.0
    %396 = vmatpush.msra.mxu0 0.0
    %397 = vmatpush.msra.mxu0 %v369
    %398 = vmatpush.msra.mxu0 %v367
    %399 = vmatpush.msra.mxu0 %v365
    %400 = vmatpush.msra.mxu0 %v363
    %401 = vmatpush.msra.mxu0 %v361
    %402 = vmatpush.msra.mxu0 %v359
    %403 = vmatpush.msra.mxu0 %v357
    %404 = vmatpush.msra.mxu0 %v355
    %405 = vmatmul.f32.gmra.mxu0 %v387
    %v406 = vpop.f32.mrf.mxu0
    %v407 = vadd.f32 %v373, %v406
    %408 = vdwg.mxu0
    %409 = vmatpush.msra.mxu0 0.0
    %410 = vmatpush.msra.mxu0 0.0
    %411 = vmatpush.msra.mxu0 0.0
    %412 = vmatpush.msra.mxu0 0.0
    %413 = vmatpush.msra.mxu0 0.0
    %414 = vmatpush.msra.mxu0 0.0
    %415 = vmatpush.msra.mxu0 0.0
    %416 = vmatpush.msra.mxu0 0.0
    %417 = vmatpush.msra.mxu0 %v370
    %418 = vmatpush.msra.mxu0 %v368
    %419 = vmatpush.msra.mxu0 %v366
    %420 = vmatpush.msra.mxu0 %v364
    %421 = vmatpush.msra.mxu0 %v362
    %422 = vmatpush.msra.mxu0 %v360
    %423 = vmatpush.msra.mxu0 %v358
    %424 = vmatpush.msra.mxu0 %v356
    %425 = vmatmul.f32.gmra.mxu0 %v387
    %v426 = vpop.f32.mrf.mxu0
    %v427 = vadd.f32 %v374, %v426
    %428 = vdwg.mxu0
    %v429 = vld [vmem:[#allocation2] sm:$0xff]
    %v430 = vld [vmem:[#allocation2 + $0x8] sm:$0xff]
    %v431 = vadd.f32 %v429, %v407
    %v432 = vxor.u32 %v431, 2147483648
    %v433 = vmul.f32 %v432, 1.442695
    %v434 = vpow.pop %v433
    %v435 = vadd.f32 %v434, 1.0
    %v436 = vrcp.pop %v435
    %v437 = vmul.f32 %v435, %v436
    %v438 = vsub.f32 1.0, %v437
    %v439 = vmul.f32 %v436, %v438
    %v440 = vadd.f32 %v436, %v439
    %vm441 = vweird.f32 %v435
    %vm442 = vweird.f32 %v436
    %vm443 = vmor %vm441, %vm442
    %v444 = vsel %vm443, %v436, %v440
    %v445 = vand.u32 2147483647, %v435
    %vm446 = vcmp.eq.f32.partialorder %v445, 8.507059e+37
    %v447 = vand.u32 %v435, 2147483648
    %v448 = vor.u32 1.1754944e-38, %v447
    %v449 = vsel %vm446, %v448, %v444
    %v450 = vmul.f32 1.0, %v449
    %v451 = vmul.f32 %v450, %v427
    %v452 = vadd.f32 %v430, %v451
    %v453 = vtanh.pop %v452
    %v454 = vsub.f32 1.0, %v450
    %456 = vrot.lane.b32.xlu0 %v453, 64
    %v457 = vpop.permute.xlu0 %456
    %v459 = vmul.f32 %v454, %v457
    %460 = vrot.lane.b32.xlu0 %v384, 64
    %v461 = vpop.permute.xlu0 %460
    %v463 = vmul.f32 %v450, %v461
    %v464 = vadd.f32 %v459, %v463
    %466 = vrot.lane.b32.xlu0 %v464, 64
    %v467 = vpop.permute.xlu0 %466
    %469 = vst.msk [vmem:[#allocation12] sm:$0xff] %vm385, %v467
    %s470 = scalar_lea.vmem %s1, 8
    %v471 = vld [vmem:[%s470] sm:$0xff]
    %473 = vset.pattern.permute.xlu0 0
    %474 = vperm.xlu0 %473, %v471
    %v475 = vpop.permute.xlu0 %474
    %v477 = vmul.f32 %v464, %v475
    %479 = vrot.lane.b32.xlu0 %v477, 64
    %v480 = vpop.permute.xlu0 %479
    %v481 = vsel %vm385, %v480, 0
    %483 = vmatpush.msra.mxu0 0.0
    %484 = vmatpush.msra.mxu0 0.0
    %485 = vmatpush.msra.mxu0 0.0
    %486 = vmatpush.msra.mxu0 0.0
    %487 = vmatpush.msra.mxu0 0.0
    %488 = vmatpush.msra.mxu0 0.0
    %489 = vmatpush.msra.mxu0 0.0
    %490 = vmatpush.msra.mxu0 0.0
    %491 = vmatpush.msra.mxu0 %v369
    %492 = vmatpush.msra.mxu0 %v367
    %493 = vmatpush.msra.mxu0 %v365
    %494 = vmatpush.msra.mxu0 %v363
    %495 = vmatpush.msra.mxu0 %v361
    %496 = vmatpush.msra.mxu0 %v359
    %497 = vmatpush.msra.mxu0 %v357
    %498 = vmatpush.msra.mxu0 %v355
    %499 = vmatmul.f32.gmra.mxu0 %v481
    %v500 = vpop.f32.mrf.mxu0
    %v501 = vadd.f32 %v373, %v500
    %502 = vdwg.mxu0
    %503 = vmatpush.msra.mxu0 0.0
    %504 = vmatpush.msra.mxu0 0.0
    %505 = vmatpush.msra.mxu0 0.0
    %506 = vmatpush.msra.mxu0 0.0
    %507 = vmatpush.msra.mxu0 0.0
    %508 = vmatpush.msra.mxu0 0.0
    %509 = vmatpush.msra.mxu0 0.0
    %510 = vmatpush.msra.mxu0 0.0
    %511 = vmatpush.msra.mxu0 %v370
    %512 = vmatpush.msra.mxu0 %v368
    %513 = vmatpush.msra.mxu0 %v366
    %514 = vmatpush.msra.mxu0 %v364
    %515 = vmatpush.msra.mxu0 %v362
    %516 = vmatpush.msra.mxu0 %v360
    %517 = vmatpush.msra.mxu0 %v358
    %518 = vmatpush.msra.mxu0 %v356
    %519 = vmatmul.f32.gmra.mxu0 %v481
    %v520 = vpop.f32.mrf.mxu0
    %v521 = vadd.f32 %v374, %v520
    %522 = vdwg.mxu0
    %s523 = scalar_lea.vmem [#allocation2], 16
    %v524 = vld [vmem:[%s523] sm:$0xff]
    %v525 = vld [vmem:[%s523 + $0x8] sm:$0xff]
    %v526 = vadd.f32 %v524, %v501
    %v527 = vxor.u32 %v526, 2147483648
    %v528 = vmul.f32 %v527, 1.442695
    %v529 = vpow.pop %v528
    %v530 = vadd.f32 %v529, 1.0
    %v531 = vrcp.pop %v530
    %v532 = vmul.f32 %v530, %v531
    %v533 = vsub.f32 1.0, %v532
    %v534 = vmul.f32 %v531, %v533
    %v535 = vadd.f32 %v531, %v534
    %vm536 = vweird.f32 %v530
    %vm537 = vweird.f32 %v531
    %vm538 = vmor %vm536, %vm537
    %v539 = vsel %vm538, %v531, %v535
    %v540 = vand.u32 2147483647, %v530
    %vm541 = vcmp.eq.f32.partialorder %v540, 8.507059e+37
    %v542 = vand.u32 %v530, 2147483648
    %v543 = vor.u32 1.1754944e-38, %v542
    %v544 = vsel %vm541, %v543, %v539
    %v545 = vmul.f32 1.0, %v544
    %v546 = vmul.f32 %v545, %v521
    %v547 = vadd.f32 %v525, %v546
    %v548 = vtanh.pop %v547
    %v549 = vsub.f32 1.0, %v545
    %551 = vrot.lane.b32.xlu0 %v548, 64
    %v552 = vpop.permute.xlu0 %551
    %v554 = vmul.f32 %v549, %v552
    %v555 = vmul.f32 %v545, %v477
    %v556 = vadd.f32 %v554, %v555
    %558 = vrot.lane.b32.xlu0 %v556, 64
    %v559 = vpop.permute.xlu0 %558
    %s561 = scalar_lea.vmem [#allocation12], 8
    %562 = vst.msk [vmem:[%s561] sm:$0xff] %vm385, %v559
    %s563 = scalar_lea.vmem %s1, 16
    %v564 = vld [vmem:[%s563] sm:$0xff]
    %566 = vset.pattern.permute.xlu0 0
    %567 = vperm.xlu0 %566, %v564
    %v568 = vpop.permute.xlu0 %567
    %v570 = vmul.f32 %v556, %v568
    %572 = vrot.lane.b32.xlu0 %v570, 64
    %v573 = vpop.permute.xlu0 %572
    %v574 = vsel %vm385, %v573, 0
    %576 = vmatpush.msra.mxu0 0.0
    %577 = vmatpush.msra.mxu0 0.0
    %578 = vmatpush.msra.mxu0 0.0
    %579 = vmatpush.msra.mxu0 0.0
    %580 = vmatpush.msra.mxu0 0.0
    %581 = vmatpush.msra.mxu0 0.0
    %582 = vmatpush.msra.mxu0 0.0
    %583 = vmatpush.msra.mxu0 0.0
    %584 = vmatpush.msra.mxu0 %v369
    %585 = vmatpush.msra.mxu0 %v367
    %586 = vmatpush.msra.mxu0 %v365
    %587 = vmatpush.msra.mxu0 %v363
    %588 = vmatpush.msra.mxu0 %v361
    %589 = vmatpush.msra.mxu0 %v359
    %590 = vmatpush.msra.mxu0 %v357
    %591 = vmatpush.msra.mxu0 %v355
    %592 = vmatmul.f32.gmra.mxu0 %v574
    %v593 = vpop.f32.mrf.mxu0
    %v594 = vadd.f32 %v373, %v593
    %595 = vdwg.mxu0
    %596 = vmatpush.msra.mxu0 0.0
    %597 = vmatpush.msra.mxu0 0.0
    %598 = vmatpush.msra.mxu0 0.0
    %599 = vmatpush.msra.mxu0 0.0
    %600 = vmatpush.msra.mxu0 0.0
    %601 = vmatpush.msra.mxu0 0.0
    %602 = vmatpush.msra.mxu0 0.0
    %603 = vmatpush.msra.mxu0 0.0
    %604 = vmatpush.msra.mxu0 %v370
    %605 = vmatpush.msra.mxu0 %v368
    %606 = vmatpush.msra.mxu0 %v366
    %607 = vmatpush.msra.mxu0 %v364
    %608 = vmatpush.msra.mxu0 %v362
    %609 = vmatpush.msra.mxu0 %v360
    %610 = vmatpush.msra.mxu0 %v358
    %611 = vmatpush.msra.mxu0 %v356
    %612 = vmatmul.f32.gmra.mxu0 %v574
    %v613 = vpop.f32.mrf.mxu0
    %v614 = vadd.f32 %v374, %v613
    %615 = vdwg.mxu0
    %s616 = scalar_lea.vmem [#allocation2], 32
    %v617 = vld [vmem:[%s616] sm:$0xff]
    %v618 = vld [vmem:[%s616 + $0x8] sm:$0xff]
    %v619 = vadd.f32 %v617, %v594
    %v620 = vxor.u32 %v619, 2147483648
    %v621 = vmul.f32 %v620, 1.442695
    %v622 = vpow.pop %v621
    %v623 = vadd.f32 %v622, 1.0
    %v624 = vrcp.pop %v623
    %v625 = vmul.f32 %v623, %v624
    %v626 = vsub.f32 1.0, %v625
    %v627 = vmul.f32 %v624, %v626
    %v628 = vadd.f32 %v624, %v627
    %vm629 = vweird.f32 %v623
    %vm630 = vweird.f32 %v624
    %vm631 = vmor %vm629, %vm630
    %v632 = vsel %vm631, %v624, %v628
    %v633 = vand.u32 2147483647, %v623
    %vm634 = vcmp.eq.f32.partialorder %v633, 8.507059e+37
    %v635 = vand.u32 %v623, 2147483648
    %v636 = vor.u32 1.1754944e-38, %v635
    %v637 = vsel %vm634, %v636, %v632
    %v638 = vmul.f32 1.0, %v637
    %v639 = vmul.f32 %v638, %v614
    %v640 = vadd.f32 %v618, %v639
    %v641 = vtanh.pop %v640
    %v642 = vsub.f32 1.0, %v638
    %644 = vrot.lane.b32.xlu0 %v641, 64
    %v645 = vpop.permute.xlu0 %644
    %v647 = vmul.f32 %v642, %v645
    %v648 = vmul.f32 %v638, %v570
    %v649 = vadd.f32 %v647, %v648
    %651 = vrot.lane.b32.xlu0 %v649, 64
    %v652 = vpop.permute.xlu0 %651
    %s654 = scalar_lea.vmem [#allocation12], 16
    %655 = vst.msk [vmem:[%s654] sm:$0xff] %vm385, %v652
    %s656 = scalar_lea.vmem %s1, 24
    %v657 = vld [vmem:[%s656] sm:$0xff]
    %659 = vset.pattern.permute.xlu0 0
    %660 = vperm.xlu0 %659, %v657
    %v661 = vpop.permute.xlu0 %660
    %v663 = vmul.f32 %v649, %v661
    %665 = vrot.lane.b32.xlu0 %v663, 64
    %v666 = vpop.permute.xlu0 %665
    %v667 = vsel %vm385, %v666, 0
    %669 = vmatpush.msra.mxu0 0.0
    %670 = vmatpush.msra.mxu0 0.0
    %671 = vmatpush.msra.mxu0 0.0
    %672 = vmatpush.msra.mxu0 0.0
    %673 = vmatpush.msra.mxu0 0.0
    %674 = vmatpush.msra.mxu0 0.0
    %675 = vmatpush.msra.mxu0 0.0
    %676 = vmatpush.msra.mxu0 0.0
    %677 = vmatpush.msra.mxu0 %v369
    %678 = vmatpush.msra.mxu0 %v367
    %679 = vmatpush.msra.mxu0 %v365
    %680 = vmatpush.msra.mxu0 %v363
    %681 = vmatpush.msra.mxu0 %v361
    %682 = vmatpush.msra.mxu0 %v359
    %683 = vmatpush.msra.mxu0 %v357
    %684 = vmatpush.msra.mxu0 %v355
    %685 = vmatmul.f32.gmra.mxu0 %v667
    %v686 = vpop.f32.mrf.mxu0
    %v687 = vadd.f32 %v373, %v686
    %688 = vdwg.mxu0
    %689 = vmatpush.msra.mxu0 0.0
    %690 = vmatpush.msra.mxu0 0.0
    %691 = vmatpush.msra.mxu0 0.0
    %692 = vmatpush.msra.mxu0 0.0
    %693 = vmatpush.msra.mxu0 0.0
    %694 = vmatpush.msra.mxu0 0.0
    %695 = vmatpush.msra.mxu0 0.0
    %696 = vmatpush.msra.mxu0 0.0
    %697 = vmatpush.msra.mxu0 %v370
    %698 = vmatpush.msra.mxu0 %v368
    %699 = vmatpush.msra.mxu0 %v366
    %700 = vmatpush.msra.mxu0 %v364
    %701 = vmatpush.msra.mxu0 %v362
    %702 = vmatpush.msra.mxu0 %v360
    %703 = vmatpush.msra.mxu0 %v358
    %704 = vmatpush.msra.mxu0 %v356
    %705 = vmatmul.f32.gmra.mxu0 %v667
    %v706 = vpop.f32.mrf.mxu0
    %v707 = vadd.f32 %v374, %v706
    %708 = vdwg.mxu0
    %s709 = scalar_lea.vmem [#allocation2], 48
    %v710 = vld [vmem:[%s709] sm:$0xff]
    %v711 = vld [vmem:[%s709 + $0x8] sm:$0xff]
    %v712 = vadd.f32 %v710, %v687
    %v713 = vxor.u32 %v712, 2147483648
    %v714 = vmul.f32 %v713, 1.442695
    %v715 = vpow.pop %v714
    %v716 = vadd.f32 %v715, 1.0
    %v717 = vrcp.pop %v716
    %v718 = vmul.f32 %v716, %v717
    %v719 = vsub.f32 1.0, %v718
    %v720 = vmul.f32 %v717, %v719
    %v721 = vadd.f32 %v717, %v720
    %vm722 = vweird.f32 %v716
    %vm723 = vweird.f32 %v717
    %vm724 = vmor %vm722, %vm723
    %v725 = vsel %vm724, %v717, %v721
    %v726 = vand.u32 2147483647, %v716
    %vm727 = vcmp.eq.f32.partialorder %v726, 8.507059e+37
    %v728 = vand.u32 %v716, 2147483648
    %v729 = vor.u32 1.1754944e-38, %v728
    %v730 = vsel %vm727, %v729, %v725
    %v731 = vmul.f32 1.0, %v730
    %v732 = vmul.f32 %v731, %v707
    %v733 = vadd.f32 %v711, %v732
    %v734 = vtanh.pop %v733
    %v735 = vsub.f32 1.0, %v731
    %737 = vrot.lane.b32.xlu0 %v734, 64
    %v738 = vpop.permute.xlu0 %737
    %v740 = vmul.f32 %v735, %v738
    %v741 = vmul.f32 %v731, %v663
    %v742 = vadd.f32 %v740, %v741
    %744 = vrot.lane.b32.xlu0 %v742, 64
    %v745 = vpop.permute.xlu0 %744
    %s747 = scalar_lea.vmem [#allocation12], 24
    %748 = vst.msk [vmem:[%s747] sm:$0xff] %vm385, %v745
    %749 = vst.msk [vmem:[#allocation13] sm:$0xff] %vm385, %v745
    // Predicated region
    $region66: #{_mlpbase_rollout.1} parent=1 // pred_check
      _
    $region67: #{_mlpbase_rollout.1} parent=1 // pred_check_branch
      %751 = sbr.rel (0) target = $region69
    $region68: #{_mlpbase_rollout.1} parent=1 // pred_region
      _
    $region69: #{_mlpbase_rollout.1} parent=1 // pred_fallthru
      _
    // Predicated region
    $region70: #{_mlpbase_rollout.1} parent=1 // pred_check
      _
    $region71: #{_mlpbase_rollout.1} parent=1 // pred_check_branch
      %753 = sbr.rel (0) target = $region73
    $region72: #{_mlpbase_rollout.1} parent=1 // pred_region
      %755 = vsyncadd [#allocation5], 0
      %s756 = sshll.u32 [#allocation12], 4
      %s757 = int_to_ptr.vmem [resolvable:$true] %s756
      %s758 = sshll.u32 %s12, 4
      %s759 = int_to_ptr.hbm [resolvable:$true] %s758
      %764 = dma.vmem_to_hbm [thread:$0]  %s757, 512, %s759, [#allocation5], 128, 128, 8
    $region73: #{_mlpbase_rollout.1} parent=1 // pred_fallthru
      _
    // Predicated region
    $region74: #{_mlpbase_rollout.1} parent=1 // pred_check
      _
    $region75: #{_mlpbase_rollout.1} parent=1 // pred_check_branch
      %766 = sbr.rel (0) target = $region77
    $region76: #{_mlpbase_rollout.1} parent=1 // pred_region
      %768 = vsyncadd [#allocation14], 0
      %s770 = sshll.u32 [#allocation13], 4
      %s771 = int_to_ptr.vmem [resolvable:$true] %s770
      %s772 = sshll.u32 %s13, 4
      %s773 = int_to_ptr.hbm [resolvable:$true] %s772
      %775 = dma.vmem_to_hbm [thread:$0]  %s771, 128, %s773, [#allocation14]
    $region77: #{_mlpbase_rollout.1} parent=1 // pred_fallthru
      _
    // Predicated region
    $region78: #{_mlpbase_rollout.1} parent=1 // pred_check
      _
    $region79: #{_mlpbase_rollout.1} parent=1 // pred_check_branch
      %777 = sbr.rel (0) target = $region81
    $region80: #{_mlpbase_rollout.1} parent=1 // pred_region
      _
    $region81: #{_mlpbase_rollout.1} parent=1 // pred_fallthru
      _
    // Predicated region
    $region82: #{_mlpbase_rollout.1} parent=1 // pred_check
      _
    $region83: #{_mlpbase_rollout.1} parent=1 // pred_check_branch
      %779 = sbr.rel (0) target = $region85
    $region84: #{_mlpbase_rollout.1} parent=1 // pred_region
      %781 = dma.done [#allocation5], 512
    $region85: #{_mlpbase_rollout.1} parent=1 // pred_fallthru
      _
    // Predicated region
    $region86: #{_mlpbase_rollout.1} parent=1 // pred_check
      _
    $region87: #{_mlpbase_rollout.1} parent=1 // pred_check_branch
      %783 = sbr.rel (0) target = $region89
    $region88: #{_mlpbase_rollout.1} parent=1 // pred_region
      %785 = dma.done [#allocation14], 128
    $region89: #{_mlpbase_rollout.1} parent=1 // pred_fallthru
      _
    %786 = vsyncpa [#allocation4], 1
    %787 = vsyncpa [#allocation7], 1
    %788 = vsyncpa [#allocation10], 1
    %789 = vsyncpa [#allocation5], 1
    %790 = vsyncpa [#allocation14], 1

</llo_original>
